<compile_context>
chip_gen: v7x
topology: tpu7x:2x2x1
jax: 0.10.0
libtpu: 0.0.40
codegen_flags: <defaults>
</compile_context>

<pallas_src>
import functools

import jax
import jax.numpy as jnp
from jax.experimental import pallas as pl
from jax.experimental.pallas import tpu as pltpu


def _round_up(x: int, m: int) -> int:
    return (x + m - 1) // m * m


def _pad_feature(d: int) -> int:
    # Lane-dense padding.  v6e/v7x MXUs are 256 wide, so dims >= 256 pad to a
    # multiple of 256; smaller dims pad to the 128-lane width.  (On v5e a
    # 128-multiple would suffice; the extra zero lanes are harmless.)
    return _round_up(d, 256) if d >= 256 else _round_up(d, 128)


def _pick_tile_b(batch: int, sublane: int, tile_b_max: int) -> int:
    """Largest sublane-aligned batch tile <= tile_b_max minimizing zero-row padding."""
    tile_b_max = max(_round_up(tile_b_max, sublane), sublane)
    if batch <= tile_b_max:
        return _round_up(batch, sublane)
    min_pad = _round_up(batch, sublane) - batch  # best achievable waste
    best_t, best_pad = sublane, None
    for t in range(tile_b_max, sublane - 1, -sublane):
        pad = _round_up(batch, t) - batch
        if best_pad is None or pad < best_pad:
            best_t, best_pad = t, pad
            if pad == min_pad:
                break
    return best_t


def _fused_mlp_kernel(*refs, n_layers: int, matmul_dtype):
    """Fused MLP body.

    refs = (x_ref, w0_ref, b0_ref, w1_ref, b1_ref, ..., o_ref)
      x_ref : (TILE_B, D0p)      VMEM, matmul_dtype
      wi_ref: (D{i}p, D{i+1}p)   VMEM, matmul_dtype (pre-transposed to (in,out))
      bi_ref: (1, D{i+1}p)       VMEM, float32
      o_ref : (TILE_B, DLp)      VMEM
    Layer loop is unrolled at trace time; the activation never leaves
    vregs/VMEM between layers.
    """
    x_ref = refs[0]
    o_ref = refs[-1]
    wb_refs = refs[1:-1]

    h = x_ref[...]  # already matmul_dtype
    for i in range(n_layers):
        w = wb_refs[2 * i][...]
        b = wb_refs[2 * i + 1][...]
        # MXU matmul with f32 accumulation; bias (VPU) + tanh (EUP) in f32.
        y = jnp.dot(h, w, preferred_element_type=jnp.float32) + b
        if i < n_layers - 1:
            h = jnp.tanh(y).astype(matmul_dtype)
        else:
            h = y
    o_ref[...] = h.astype(o_ref.dtype)
    # TODO(synk): if ld/st slot utilization shows spills at large tile_b, stage
    # `h` through an explicit VMEM scratch instead of relying on regalloc.


def prepare_mlp_params(params, matmul_dtype=jnp.bfloat16):
    """Pad + cast weights/biases ONCE (hoisted out of the per-call path).

    params: list of (w_t, b) with w_t: (Din, Dout) (transposed PyTorch layout)
            and b: (Dout,) or (1, Dout).
    Returns list of (w_padded, b_padded): lane-dense zero-padded, weights cast
    to `matmul_dtype`, biases kept float32.  Zero padding is semantics
    preserving (tanh(0)=0 propagates through padded lanes).
    """
    dims = [params[0][0].shape[0]] + [w_t.shape[1] for w_t, _ in params]
    dims_p = [_pad_feature(d) for d in dims]
    prepared = []
    for li, (w_t, b) in enumerate(params):
        din, dout = w_t.shape
        w_p = jnp.zeros((dims_p[li], dims_p[li + 1]), matmul_dtype)
        w_p = w_p.at[:din, :dout].set(jnp.asarray(w_t, matmul_dtype))
        b_p = jnp.zeros((1, dims_p[li + 1]), jnp.float32)
        b_p = b_p.at[:, :dout].set(jnp.reshape(jnp.asarray(b, jnp.float32), (1, -1)))
        prepared.append((w_p, b_p))
    return prepared


@functools.partial(jax.jit, static_argnames=("out_features", "tile_b_max"))
def mlp_forward(x, prepared_params, *, out_features, tile_b_max=512):
    """Fused MLP forward as a single Pallas kernel.

    x               : (B, D0) input (float32 in/out regardless of matmul dtype).
    prepared_params : output of prepare_mlp_params (pre-padded weights/biases).
    out_features    : true (unpadded) output feature count, for the final slice.
    """
    batch, d_in = x.shape
    n_layers = len(prepared_params)
    matmul_dtype = prepared_params[0][0].dtype
    dims_p = [prepared_params[0][0].shape[0]] + [w.shape[1] for w, _ in prepared_params]
    d_in_p, d_out_p = dims_p[0], dims_p[-1]
    out_dtype = x.dtype

    # Batch tiling: sublane-aligned (16 rows for bf16, 8 for f32), minimal padding.
    itemsize_mm = jnp.dtype(matmul_dtype).itemsize
    sublane = 8 * (4 // itemsize_mm)
    tile_b = _pick_tile_b(batch, sublane, tile_b_max)
    b_pad = _round_up(batch, tile_b)

    # Only the activation is padded per call; fast path if already aligned.
    x_c = x.astype(matmul_dtype)
    if (b_pad, d_in_p) != (batch, d_in):
        x_p = jnp.zeros((b_pad, d_in_p), matmul_dtype).at[:batch, :d_in].set(x_c)
    else:
        x_p = x_c

    inputs = [x_p]
    in_specs = [pl.BlockSpec((tile_b, d_in_p), lambda i: (i, 0))]
    for w_p, b_p in prepared_params:
        inputs.append(w_p)
        inputs.append(b_p)
        # Constant index_map -> single-buffered: double-buffering the resident
        # weights would only waste VMEM (critical on v7x's 64 MiB).
        in_specs.append(pl.BlockSpec(w_p.shape, lambda i: (0, 0),
                                     pipeline_mode=pl.Buffered(1)))
        in_specs.append(pl.BlockSpec(b_p.shape, lambda i: (0, 0),
                                     pipeline_mode=pl.Buffered(1)))

    # Scheduling hint for XLA + explicit VMEM budget (v7x: 64 MiB per TC).
    weight_bytes = sum(w.size * w.dtype.itemsize + b.size * b.dtype.itemsize
                       for w, b in prepared_params)
    flops = 2 * b_pad * sum(dims_p[i] * dims_p[i + 1] for i in range(n_layers))
    transcendentals = b_pad * sum(dims_p[1:-1])
    bytes_accessed = (b_pad * d_in_p * itemsize_mm + weight_bytes
                      + b_pad * d_out_p * jnp.dtype(out_dtype).itemsize)
    io_bytes = 2 * tile_b * (d_in_p * itemsize_mm
                             + d_out_p * jnp.dtype(out_dtype).itemsize)
    act_bytes = 2 * tile_b * max(dims_p) * 4
    vmem_limit = int(min(max(2 * (weight_bytes + io_bytes + act_bytes),
                             32 * 2**20), 64 * 2**20))
    # TODO(synk): once sum(padded weight bytes) exceeds ~40-48 MiB (v7x VMEM),
    # switch to a K/N-tiled reduction grid (P1+P3) instead of resident weights.

    kernel = functools.partial(
        _fused_mlp_kernel, n_layers=n_layers, matmul_dtype=matmul_dtype)

    out_p = pl.pallas_call(
        kernel,
        out_shape=jax.ShapeDtypeStruct((b_pad, d_out_p), out_dtype),
        grid=(b_pad // tile_b,),
        in_specs=in_specs,
        out_specs=pl.BlockSpec((tile_b, d_out_p), lambda i: (i, 0)),
        compiler_params=pltpu.CompilerParams(
            # Batch axis is embarrassingly parallel -> v7x megacore sharding.
            dimension_semantics=("parallel",),
            vmem_limit_bytes=vmem_limit,
        ),
        cost_estimate=pl.CostEstimate(
            flops=flops,
            transcendentals=transcendentals,
            bytes_accessed=bytes_accessed,
        ),
    )(*inputs)

    return out_p[:batch, :out_features]


def init_mlp_params(key, sizes, dtype=jnp.float32):
    """PyTorch-style nn.Linear init: U(-1/sqrt(fan_in), 1/sqrt(fan_in))."""
    params = []
    for i in range(len(sizes) - 1):
        fan_in, fan_out = sizes[i], sizes[i + 1]
        key, kw, kb = jax.random.split(key, 3)
        bound = 1.0 / jnp.sqrt(jnp.asarray(fan_in, dtype))
        # stored directly as (in, out) == transposed PyTorch layout
        w_t = jax.random.uniform(kw, (fan_in, fan_out), dtype, -bound, bound)
        b = jax.random.uniform(kb, (1, fan_out), dtype, -bound, bound)
        params.append((w_t, b))
    return params


if __name__ == "__main__":
    # Small shapes implied by the module: MLP(sizes=(32, 64, 16)), batch=8.
    sizes = (32, 64, 16)
    batch = 8

    key = jax.random.PRNGKey(0)
    key, kx = jax.random.split(key)
    x = jax.random.normal(kx, (batch, sizes[0]), jnp.float32)
    params = init_mlp_params(key, sizes)

    # Reference in plain JAX (same math as the PyTorch module).
    ref = x
    for i, (w_t, b) in enumerate(params):
        ref = ref @ w_t + b
        if i < len(params) - 1:
            ref = jnp.tanh(ref)

    # Exact path (f32 matmuls) -- bit-compatible with the PyTorch reference math.
    prep_f32 = prepare_mlp_params(params, matmul_dtype=jnp.float32)
    out_f32 = jax.block_until_ready(
        mlp_forward(x, prep_f32, out_features=sizes[-1]))
    assert out_f32.shape == (batch, sizes[-1])
    assert jnp.allclose(out_f32, ref, atol=1e-5, rtol=1e-5)

    # Default fast path: bf16 weights/activations, f32 accumulation (v6e/v7x MXU).
    prep_bf16 = prepare_mlp_params(params)  # matmul_dtype=jnp.bfloat16
    out_bf16 = jax.block_until_ready(
        mlp_forward(x, prep_bf16, out_features=sizes[-1]))
    assert out_bf16.shape == (batch, sizes[-1])
    assert jnp.allclose(out_bf16, ref, atol=5e-2, rtol=5e-2)

    print("KERNEL_OK")
</pallas_src>

<mosaic_0001>
module attributes {stable_mosaic.version = 11 : i64} {
  func.func @_fused_mlp_kernel(%arg0: i32, %arg1: memref<8x128xf32, #tpu.memory_space<vmem>>, %arg2: memref<128x128xf32, #tpu.memory_space<vmem>>, %arg3: memref<1x128xf32, #tpu.memory_space<vmem>>, %arg4: memref<128x128xf32, #tpu.memory_space<vmem>>, %arg5: memref<1x128xf32, #tpu.memory_space<vmem>>, %arg6: memref<8x128xf32, #tpu.memory_space<vmem>>) attributes {dimension_semantics = [#tpu.dimension_semantics<parallel>], iteration_bounds = array<i64: 1>, scalar_prefetch = 0 : i64, scratch_operands = 0 : i64, tpu.core_type = #tpu.core_type<tc>, window_params = [{transform_indices = @transform_0, window_bounds = array<i64: 8, 128>}, {pipeline_mode = #tpu.pipeline_mode<synchronous>, transform_indices = @transform_1, window_bounds = array<i64: 128, 128>}, {pipeline_mode = #tpu.pipeline_mode<synchronous>, transform_indices = @transform_2, window_bounds = array<i64: 1, 128>}, {pipeline_mode = #tpu.pipeline_mode<synchronous>, transform_indices = @transform_3, window_bounds = array<i64: 128, 128>}, {pipeline_mode = #tpu.pipeline_mode<synchronous>, transform_indices = @transform_4, window_bounds = array<i64: 1, 128>}, {transform_indices = @transform_5, window_bounds = array<i64: 8, 128>}]} {
    %c0 = arith.constant 0 : index
    %c0_0 = arith.constant 0 : index
    %0 = vector.load %arg1[%c0, %c0_0] : memref<8x128xf32, #tpu.memory_space<vmem>>, vector<8x128xf32>
    %c0_1 = arith.constant 0 : index
    %c0_2 = arith.constant 0 : index
    %1 = vector.load %arg2[%c0_1, %c0_2] : memref<128x128xf32, #tpu.memory_space<vmem>>, vector<128x128xf32>
    %c0_3 = arith.constant 0 : index
    %c0_4 = arith.constant 0 : index
    %2 = vector.load %arg3[%c0_3, %c0_4] : memref<1x128xf32, #tpu.memory_space<vmem>>, vector<1x128xf32>
    %cst = arith.constant dense<0.000000e+00> : vector<8x128xf32>
    %3 = tpu.matmul %0, %1, %cst {dimension_numbers = #tpu.dot_dimension_numbers<[1], [0], [0], [1], [0, 0, 1, 1], [], []>} : vector<8x128xf32>, vector<128x128xf32>, vector<8x128xf32> -> vector<8x128xf32>
    %4 = vector.broadcast %2 : vector<1x128xf32> to vector<8x128xf32>
    %5 = arith.addf %3, %4 : vector<8x128xf32>
    %6 = math.tanh %5 : vector<8x128xf32>
    %c0_5 = arith.constant 0 : index
    %c0_6 = arith.constant 0 : index
    %7 = vector.load %arg4[%c0_5, %c0_6] : memref<128x128xf32, #tpu.memory_space<vmem>>, vector<128x128xf32>
    %c0_7 = arith.constant 0 : index
    %c0_8 = arith.constant 0 : index
    %8 = vector.load %arg5[%c0_7, %c0_8] : memref<1x128xf32, #tpu.memory_space<vmem>>, vector<1x128xf32>
    %cst_9 = arith.constant dense<0.000000e+00> : vector<8x128xf32>
    %9 = tpu.matmul %6, %7, %cst_9 {dimension_numbers = #tpu.dot_dimension_numbers<[1], [0], [0], [1], [0, 0, 1, 1], [], []>} : vector<8x128xf32>, vector<128x128xf32>, vector<8x128xf32> -> vector<8x128xf32>
    %10 = vector.broadcast %8 : vector<1x128xf32> to vector<8x128xf32>
    %11 = arith.addf %9, %10 : vector<8x128xf32>
    %c0_10 = arith.constant 0 : index
    %c0_11 = arith.constant 0 : index
    %12 = vector.load %arg6[%c0_10, %c0_11] : memref<8x128xf32, #tpu.memory_space<vmem>>, vector<8x128xf32>
    tpu.vector_store %arg6[%c0_10, %c0_11], %11 {strides = array<i32>} : memref<8x128xf32, #tpu.memory_space<vmem>>, vector<8x128xf32>,
    return
  }
  func.func @transform_0(%arg0: i32) -> (i32, i32) {
    %c0_i32 = arith.constant 0 : i32
    %c0_i32_0 = arith.constant 0 : i32
    return %arg0, %c0_i32 : i32, i32
  }
  func.func @transform_1(%arg0: i32) -> (i32, i32) {
    %c0_i32 = arith.constant 0 : i32
    %c0_i32_0 = arith.constant 0 : i32
    %c0_i32_1 = arith.constant 0 : i32
    return %c0_i32, %c0_i32_0 : i32, i32
  }
  func.func @transform_2(%arg0: i32) -> (i32, i32) {
    %c0_i32 = arith.constant 0 : i32
    %c0_i32_0 = arith.constant 0 : i32
    %c0_i32_1 = arith.constant 0 : i32
    return %c0_i32, %c0_i32_0 : i32, i32
  }
  func.func @transform_3(%arg0: i32) -> (i32, i32) {
    %c0_i32 = arith.constant 0 : i32
    %c0_i32_0 = arith.constant 0 : i32
    %c0_i32_1 = arith.constant 0 : i32
    return %c0_i32, %c0_i32_0 : i32, i32
  }
  func.func @transform_4(%arg0: i32) -> (i32, i32) {
    %c0_i32 = arith.constant 0 : i32
    %c0_i32_0 = arith.constant 0 : i32
    %c0_i32_1 = arith.constant 0 : i32
    return %c0_i32, %c0_i32_0 : i32, i32
  }
  func.func @transform_5(%arg0: i32) -> (i32, i32) {
    %c0_i32 = arith.constant 0 : i32
    %c0_i32_0 = arith.constant 0 : i32
    return %arg0, %c0_i32 : i32, i32
  }
}

</mosaic_0001>

<llo_original>
// kernel: mlp_forward.1
$region0: #{mlp_forward.1}
  #allocation0 [shape = 'u32[]', space=smem, size = 0x4, offset = 0x4, fixed_abs, tag = 'smem constant byte address 0x4 - core index']
  #allocation1 [shape = 'u32[144,128]{1,0:T(1,128)}', space=vmem, size = 0x12000, scoped, tag = 'internal scratch']
  %s0 = inlined_call_operand.vmem [shape: f32[8,128], index: 0, kind: input, shape index: {}]
  %s1 = inlined_call_operand.hbm [shape: f32[128,128], index: 1, kind: input, shape index: {}]
  %s2 = inlined_call_operand.vmem [shape: f32[1,128], index: 2, kind: input, shape index: {}]
  %s3 = inlined_call_operand.hbm [shape: f32[128,128], index: 3, kind: input, shape index: {}]
  %s4 = inlined_call_operand.vmem [shape: f32[1,128], index: 4, kind: input, shape index: {}]
  %s5 = inlined_call_operand.hbm [shape: f32[8,128], index: 5, kind: output, shape index: {}]
  %s6 = sld [smem:[#allocation0]]
  $region38: #{mlp_forward.1} parent=0
    _
  %s8 = ssub.s32 1, %s6
  %s9 = scalar_select 0, %s8, %s6
  $region1: #{mlp_forward.1} parent=0
    #allocation2 [shape = 'u8[65536]{0}', space=vmem, size = 0x10000, scoped, tag = 'input window, operand 1, single buffered']
    #allocation3 [shape = 's32[1]{0}', space=sflag, size = 0x4, scoped, tag = 'scoped memory for mlp_forward.1']
    #allocation4 [shape = 's32[1]{0}', space=sflag, size = 0x4, scoped, tag = 'scoped memory for mlp_forward.1']
    #allocation5 [shape = 'u8[65536]{0}', space=vmem, size = 0x10000, scoped, tag = 'input window, operand 3, single buffered']
    #allocation6 [shape = 's32[1]{0}', space=sflag, size = 0x4, scoped, tag = 'scoped memory for mlp_forward.1']
    #allocation7 [shape = 'u8[4096]{0}', space=vmem, size = 0x1000, scoped, tag = 'output window, operand 0, single buffered']
    %10 = vsyncpa [#allocation3], 0
    %11 = vsyncpa [#allocation6], 0
    %12 = vsyncpa [#allocation4], 0
    // Predicated region
    $region2: #{mlp_forward.1} parent=1 // pred_check
      _
    $region3: #{mlp_forward.1} parent=1 // pred_check_branch
      %14 = sbr.rel (0) target = $region5
    $region4: #{mlp_forward.1} parent=1 // pred_region
      _
    $region5: #{mlp_forward.1} parent=1 // pred_fallthru
      _
    // Predicated region
    $region6: #{mlp_forward.1} parent=1 // pred_check
      _
    $region7: #{mlp_forward.1} parent=1 // pred_check_branch
      %16 = sbr.rel (0) target = $region9
    $region8: #{mlp_forward.1} parent=1 // pred_region
      %s18 = ssub.s32 2048, 2048
      %19 = vsyncadd [#allocation3], %s18
      %s20 = sshll.u32 [#allocation2], 4
      %s21 = int_to_ptr.vmem [resolvable:$true] %s20
      %26 = dma.hbm_to_vmem [thread:$0]  %s1, 2048, %s21, [#allocation3], 128, 128, 8
    $region9: #{mlp_forward.1} parent=1 // pred_fallthru
      _
    // Predicated region
    $region10: #{mlp_forward.1} parent=1 // pred_check
      _
    $region11: #{mlp_forward.1} parent=1 // pred_check_branch
      %28 = sbr.rel (0) target = $region13
    $region12: #{mlp_forward.1} parent=1 // pred_region
      _
    $region13: #{mlp_forward.1} parent=1 // pred_fallthru
      _
    // Predicated region
    $region14: #{mlp_forward.1} parent=1 // pred_check
      _
    $region15: #{mlp_forward.1} parent=1 // pred_check_branch
      %30 = sbr.rel (0) target = $region17
    $region16: #{mlp_forward.1} parent=1 // pred_region
      %s32 = ssub.s32 2048, 2048
      %33 = vsyncadd [#allocation6], %s32
      %s34 = sshll.u32 [#allocation5], 4
      %s35 = int_to_ptr.vmem [resolvable:$true] %s34
      %40 = dma.hbm_to_vmem [thread:$0]  %s3, 2048, %s35, [#allocation6], 128, 128, 8
    $region17: #{mlp_forward.1} parent=1 // pred_fallthru
      _
    // Predicated region
    $region18: #{mlp_forward.1} parent=1 // pred_check
      _
    $region19: #{mlp_forward.1} parent=1 // pred_check_branch
      %42 = sbr.rel (0) target = $region21
    $region20: #{mlp_forward.1} parent=1 // pred_region
      _
    $region21: #{mlp_forward.1} parent=1 // pred_fallthru
      _
    // Predicated region
    $region22: #{mlp_forward.1} parent=1 // pred_check
      _
    $region23: #{mlp_forward.1} parent=1 // pred_check_branch
      %44 = sbr.rel (0) target = $region25
    $region24: #{mlp_forward.1} parent=1 // pred_region
      %45 = dma.done [#allocation3], 2048
    $region25: #{mlp_forward.1} parent=1 // pred_fallthru
      _
    // Predicated region
    $region26: #{mlp_forward.1} parent=1 // pred_check
      _
    $region27: #{mlp_forward.1} parent=1 // pred_check_branch
      %47 = sbr.rel (0) target = $region29
    $region28: #{mlp_forward.1} parent=1 // pred_region
      %48 = dma.done [#allocation6], 2048
    $region29: #{mlp_forward.1} parent=1 // pred_fallthru
      _
    %v49 = vld [vmem:[%s0] sm:$0xff]
    %v50 = vld [vmem:[#allocation2] sm:$0xff]
    %v51 = vld [vmem:[#allocation2 + $0x8] sm:$0xff]
    %v52 = vld [vmem:[#allocation2 + $0x10] sm:$0xff]
    %v53 = vld [vmem:[#allocation2 + $0x18] sm:$0xff]
    %v54 = vld [vmem:[#allocation2 + $0x20] sm:$0xff]
    %v55 = vld [vmem:[#allocation2 + $0x28] sm:$0xff]
    %v56 = vld [vmem:[#allocation2 + $0x30] sm:$0xff]
    %v57 = vld [vmem:[#allocation2 + $0x38] sm:$0xff]
    %v58 = vld [vmem:[#allocation2 + $0x40] sm:$0xff]
    %v59 = vld [vmem:[#allocation2 + $0x48] sm:$0xff]
    %v60 = vld [vmem:[#allocation2 + $0x50] sm:$0xff]
    %v61 = vld [vmem:[#allocation2 + $0x58] sm:$0xff]
    %v62 = vld [vmem:[#allocation2 + $0x60] sm:$0xff]
    %v63 = vld [vmem:[#allocation2 + $0x68] sm:$0xff]
    %v64 = vld [vmem:[#allocation2 + $0x70] sm:$0xff]
    %v65 = vld [vmem:[#allocation2 + $0x78] sm:$0xff]
    %v66 = vld [vmem:[%s2] sm:$0x1]
    %v68 = vlaneseq
    %v69 = vshrl.u32 %v68, 7
    %v70 = vsub.s32 0, %v69
    %v71 = vrot.slane %v66, %v70
    %73 = vmatprep.subr.mxu0 0.0
    %74 = vmatpush1.msra.mxu0 %v50
    %75 = vmatprep.subr.mxu0 0.0
    %76 = vmatpush1.msra.mxu0 %v51
    %77 = vmatprep.subr.mxu0 0.0
    %78 = vmatpush1.msra.mxu0 %v52
    %79 = vmatprep.subr.mxu0 0.0
    %80 = vmatpush1.msra.mxu0 %v53
    %81 = vmatprep.subr.mxu0 0.0
    %82 = vmatpush1.msra.mxu0 %v54
    %83 = vmatprep.subr.mxu0 0.0
    %84 = vmatpush1.msra.mxu0 %v55
    %85 = vmatprep.subr.mxu0 0.0
    %86 = vmatpush1.msra.mxu0 %v56
    %87 = vmatprep.subr.mxu0 0.0
    %88 = vmatpush1.msra.mxu0 %v57
    %89 = vmatprep.subr.mxu0 0.0
    %90 = vmatpush1.msra.mxu0 %v58
    %91 = vmatprep.subr.mxu0 0.0
    %92 = vmatpush1.msra.mxu0 %v59
    %93 = vmatprep.subr.mxu0 0.0
    %94 = vmatpush1.msra.mxu0 %v60
    %95 = vmatprep.subr.mxu0 0.0
    %96 = vmatpush1.msra.mxu0 %v61
    %97 = vmatprep.subr.mxu0 0.0
    %98 = vmatpush1.msra.mxu0 %v62
    %99 = vmatprep.subr.mxu0 0.0
    %100 = vmatpush1.msra.mxu0 %v63
    %101 = vmatprep.subr.mxu0 0.0
    %102 = vmatpush1.msra.mxu0 %v64
    %103 = vmatprep.subr.mxu0 0.0
    %104 = vmatpush1.msra.mxu0 %v65
    %105 = vmatprep.subr.mxu0 0.0
    %106 = vmatpush1.msra.mxu0 0.0
    %107 = vmatprep.subr.mxu0 0.0
    %108 = vmatpush1.msra.mxu0 0.0
    %109 = vmatprep.subr.mxu0 0.0
    %110 = vmatpush1.msra.mxu0 0.0
    %111 = vmatprep.subr.mxu0 0.0
    %112 = vmatpush1.msra.mxu0 0.0
    %113 = vmatprep.subr.mxu0 0.0
    %114 = vmatpush1.msra.mxu0 0.0
    %115 = vmatprep.subr.mxu0 0.0
    %116 = vmatpush1.msra.mxu0 0.0
    %117 = vmatprep.subr.mxu0 0.0
    %118 = vmatpush1.msra.mxu0 0.0
    %119 = vmatprep.subr.mxu0 0.0
    %120 = vmatpush1.msra.mxu0 0.0
    %121 = vmatprep.subr.mxu0 0.0
    %122 = vmatpush1.msra.mxu0 0.0
    %123 = vmatprep.subr.mxu0 0.0
    %124 = vmatpush1.msra.mxu0 0.0
    %125 = vmatprep.subr.mxu0 0.0
    %126 = vmatpush1.msra.mxu0 0.0
    %127 = vmatprep.subr.mxu0 0.0
    %128 = vmatpush1.msra.mxu0 0.0
    %129 = vmatprep.subr.mxu0 0.0
    %130 = vmatpush1.msra.mxu0 0.0
    %131 = vmatprep.subr.mxu0 0.0
    %132 = vmatpush1.msra.mxu0 0.0
    %133 = vmatprep.subr.mxu0 0.0
    %134 = vmatpush1.msra.mxu0 0.0
    %135 = vmatprep.subr.mxu0 0.0
    %136 = vmatpush1.msra.mxu0 0.0
    %137 = vmatprep.mubr.f32.mxu0 0.0
    %138 = vmatmul.mubr.f32.gmra.mrb[0].mxu0 %v49
    %v139 = vpop.f32.mrb[0].mxu0
    %v140 = vadd.f32 %v71, %v139
    %v141 = vpop.f32.mrb[0].mxu0
    %142 = vdwg.mxu0
    %v143 = vtanh.pop %v140
    %v144 = vld [vmem:[#allocation5] sm:$0xff]
    %v145 = vld [vmem:[#allocation5 + $0x8] sm:$0xff]
    %v146 = vld [vmem:[#allocation5 + $0x10] sm:$0xff]
    %v147 = vld [vmem:[#allocation5 + $0x18] sm:$0xff]
    %v148 = vld [vmem:[#allocation5 + $0x20] sm:$0xff]
    %v149 = vld [vmem:[#allocation5 + $0x28] sm:$0xff]
    %v150 = vld [vmem:[#allocation5 + $0x30] sm:$0xff]
    %v151 = vld [vmem:[#allocation5 + $0x38] sm:$0xff]
    %v152 = vld [vmem:[#allocation5 + $0x40] sm:$0xff]
    %v153 = vld [vmem:[#allocation5 + $0x48] sm:$0xff]
    %v154 = vld [vmem:[#allocation5 + $0x50] sm:$0xff]
    %v155 = vld [vmem:[#allocation5 + $0x58] sm:$0xff]
    %v156 = vld [vmem:[#allocation5 + $0x60] sm:$0xff]
    %v157 = vld [vmem:[#allocation5 + $0x68] sm:$0xff]
    %v158 = vld [vmem:[#allocation5 + $0x70] sm:$0xff]
    %v159 = vld [vmem:[#allocation5 + $0x78] sm:$0xff]
    %v160 = vld [vmem:[%s4] sm:$0x1]
    %v162 = vlaneseq
    %v163 = vshrl.u32 %v162, 7
    %v164 = vsub.s32 0, %v163
    %v165 = vrot.slane %v160, %v164
    %167 = vmatprep.subr.mxu0 0.0
    %168 = vmatpush1.msra.mxu0 %v144
    %169 = vmatprep.subr.mxu0 0.0
    %170 = vmatpush1.msra.mxu0 %v145
    %171 = vmatprep.subr.mxu0 0.0
    %172 = vmatpush1.msra.mxu0 %v146
    %173 = vmatprep.subr.mxu0 0.0
    %174 = vmatpush1.msra.mxu0 %v147
    %175 = vmatprep.subr.mxu0 0.0
    %176 = vmatpush1.msra.mxu0 %v148
    %177 = vmatprep.subr.mxu0 0.0
    %178 = vmatpush1.msra.mxu0 %v149
    %179 = vmatprep.subr.mxu0 0.0
    %180 = vmatpush1.msra.mxu0 %v150
    %181 = vmatprep.subr.mxu0 0.0
    %182 = vmatpush1.msra.mxu0 %v151
    %183 = vmatprep.subr.mxu0 0.0
    %184 = vmatpush1.msra.mxu0 %v152
    %185 = vmatprep.subr.mxu0 0.0
    %186 = vmatpush1.msra.mxu0 %v153
    %187 = vmatprep.subr.mxu0 0.0
    %188 = vmatpush1.msra.mxu0 %v154
    %189 = vmatprep.subr.mxu0 0.0
    %190 = vmatpush1.msra.mxu0 %v155
    %191 = vmatprep.subr.mxu0 0.0
    %192 = vmatpush1.msra.mxu0 %v156
    %193 = vmatprep.subr.mxu0 0.0
    %194 = vmatpush1.msra.mxu0 %v157
    %195 = vmatprep.subr.mxu0 0.0
    %196 = vmatpush1.msra.mxu0 %v158
    %197 = vmatprep.subr.mxu0 0.0
    %198 = vmatpush1.msra.mxu0 %v159
    %199 = vmatprep.subr.mxu0 0.0
    %200 = vmatpush1.msra.mxu0 0.0
    %201 = vmatprep.subr.mxu0 0.0
    %202 = vmatpush1.msra.mxu0 0.0
    %203 = vmatprep.subr.mxu0 0.0
    %204 = vmatpush1.msra.mxu0 0.0
    %205 = vmatprep.subr.mxu0 0.0
    %206 = vmatpush1.msra.mxu0 0.0
    %207 = vmatprep.subr.mxu0 0.0
    %208 = vmatpush1.msra.mxu0 0.0
    %209 = vmatprep.subr.mxu0 0.0
    %210 = vmatpush1.msra.mxu0 0.0
    %211 = vmatprep.subr.mxu0 0.0
    %212 = vmatpush1.msra.mxu0 0.0
    %213 = vmatprep.subr.mxu0 0.0
    %214 = vmatpush1.msra.mxu0 0.0
    %215 = vmatprep.subr.mxu0 0.0
    %216 = vmatpush1.msra.mxu0 0.0
    %217 = vmatprep.subr.mxu0 0.0
    %218 = vmatpush1.msra.mxu0 0.0
    %219 = vmatprep.subr.mxu0 0.0
    %220 = vmatpush1.msra.mxu0 0.0
    %221 = vmatprep.subr.mxu0 0.0
    %222 = vmatpush1.msra.mxu0 0.0
    %223 = vmatprep.subr.mxu0 0.0
    %224 = vmatpush1.msra.mxu0 0.0
    %225 = vmatprep.subr.mxu0 0.0
    %226 = vmatpush1.msra.mxu0 0.0
    %227 = vmatprep.subr.mxu0 0.0
    %228 = vmatpush1.msra.mxu0 0.0
    %229 = vmatprep.subr.mxu0 0.0
    %230 = vmatpush1.msra.mxu0 0.0
    %231 = vmatprep.mubr.f32.mxu0 0.0
    %232 = vmatmul.mubr.f32.gmra.mrb[0].mxu0 %v143
    %v233 = vpop.f32.mrb[0].mxu0
    %v234 = vadd.f32 %v165, %v233
    %v235 = vpop.f32.mrb[0].mxu0
    %236 = vdwg.mxu0
    %237 = vst [vmem:[#allocation7] sm:$0xff] %v234
    // Predicated region
    $region30: #{mlp_forward.1} parent=1 // pred_check
      _
    $region31: #{mlp_forward.1} parent=1 // pred_check_branch
      %239 = sbr.rel (0) target = $region33
    $region32: #{mlp_forward.1} parent=1 // pred_region
      %s241 = ssub.s32 128, 128
      %242 = vsyncadd [#allocation4], %s241
      %s244 = sshll.u32 [#allocation7], 4
      %s245 = int_to_ptr.vmem [resolvable:$true] %s244
      %247 = dma.vmem_to_hbm [thread:$0]  %s245, 128, %s5, [#allocation4]
    $region33: #{mlp_forward.1} parent=1 // pred_fallthru
      _
    // Predicated region
    $region34: #{mlp_forward.1} parent=1 // pred_check
      _
    $region35: #{mlp_forward.1} parent=1 // pred_check_branch
      %249 = sbr.rel (0) target = $region37
    $region36: #{mlp_forward.1} parent=1 // pred_region
      %250 = dma.done [#allocation4], 128
    $region37: #{mlp_forward.1} parent=1 // pred_fallthru
      _
    %251 = vsyncpa [#allocation3], 1
    %252 = vsyncpa [#allocation6], 1
    %253 = vsyncpa [#allocation4], 1

</llo_original>
